<compile_context>
chip_gen: v7x
topology: tpu7x:2x2x1
jax: 0.10.0
libtpu: 0.0.40
codegen_flags: <defaults>
</compile_context>

<pallas_src>
import functools

import jax
import jax.numpy as jnp
from jax.experimental import pallas as pl
from jax.experimental.pallas import tpu as pltpu


# ----------------------------------------------------------------------------
# Kernels
# ----------------------------------------------------------------------------
def _pw_conv_kernel(x_ref, w_ref, scale_ref, shift_ref, o_ref):
    """k=1 path: SiLU(BN(W[C2,C1] @ X[C1,thw])) for one pixel tile."""
    # In-kernel bf16 cast of the activations (f32 in HBM), f32 MXU accumulation.
    y = jnp.dot(w_ref[...], x_ref[...].astype(jnp.bfloat16),
                preferred_element_type=jnp.float32)
    y = y * scale_ref[...] + shift_ref[...]                   # folded BN (f32)
    o_ref[...] = (y * jax.nn.sigmoid(y)).astype(o_ref.dtype)  # SiLU


def _im2col_conv_kernel(x_ref, w_ref, m_ref, scale_ref, shift_ref, o_ref, *,
                        k, pad, width, hwp):
    """k>1 path: build the im2col tile (C1*k*k, HWp) in VMEM from static shifted
    slices of the single height-padded, flattened image, then one MXU dot with
    the taps folded into the contraction dim."""
    taps = []
    for dy in range(k):
        for dx in range(k):
            s = dy * width + dx                       # static offset of this tap
            t = x_ref[:, s:s + hwp]                   # (C1, HWp) f32
            if dx != pad:                             # center column never wraps
                t = t * m_ref[dx:dx + 1, :]           # zero the width wrap-around
            taps.append(t.astype(jnp.bfloat16))
    xt = jnp.concatenate(taps, axis=0)                # (k*k*C1, HWp) bf16
    y = jnp.dot(w_ref[...], xt, preferred_element_type=jnp.float32)
    y = y * scale_ref[...] + shift_ref[...]
    o_ref[...] = (y * jax.nn.sigmoid(y)).astype(o_ref.dtype)


# ----------------------------------------------------------------------------
# VMEM-budget helpers (generation aware)
# ----------------------------------------------------------------------------
def _vmem_cap_bytes():
    try:
        return int(pltpu.get_tpu_info().vmem_capacity_bytes)
    except Exception:
        return 64 << 20  # conservative: v7x physical VMEM per TensorCore


def _vmem_limit(est_bytes, cap_bytes):
    return int(min(int(cap_bytes * 0.9), max(32 << 20, 2 * est_bytes)))


def _pick_pixel_tile(hwp, c1, c2, batch, out_bytes, budget_bytes):
    """Largest multiple-of-128 pixel tile dividing hwp that fits the VMEM budget;
    keeps >= 2 grid tiles when batch == 1 so v7x's second TensorCore has work."""
    per_col = 2 * c1 * 4 + c1 * 2 + 2 * c2 * out_bytes + c2 * 4  # dbl-buf io + temps
    max_cols = max(128, budget_bytes // per_col)
    cap = hwp if batch > 1 else max(128, hwp // 2)
    best, t = 128, 128
    while t <= hwp:
        if hwp % t == 0 and t <= max_cols and t <= cap:
            best = t
        t += 128
    return best


# ----------------------------------------------------------------------------
# Wrapper: SiLU(BN(Conv2d(x))) with stride=1, pad=k//2, groups=1, dilation=1
# ----------------------------------------------------------------------------
def conv_bn_silu(x, w, gamma, beta, mean, var, *, k=1, eps=1e-5,
                 out_dtype=jnp.bfloat16):
    """x: (B, C1, H, W) f32 NCHW;  w: (C2, C1, k, k) OIHW;  returns (B, C2, H, W).

    BatchNorm is evaluated in inference mode (running stats folded into a
    per-channel affine).  Matmul operands are bf16, accumulation/epilogue f32.
    """
    B, C1, H, W = x.shape
    C2 = w.shape[0]
    assert w.shape == (C2, C1, k, k)
    assert k % 2 == 1, "even k changes the output spatial size (unsupported)"
    # TODO(synk): only module defaults s=1, g=1, d=1 and eval-mode BN supported.
    pad = k // 2
    HW = H * W
    HWp = ((HW + 127) // 128) * 128          # lane-dense pixel axis

    # Fold BatchNorm (running stats) into a per-channel affine.
    scale_vec = (gamma / jnp.sqrt(var + eps)).astype(jnp.float32)
    shift_vec = (beta - mean * scale_vec).astype(jnp.float32)
    scale = scale_vec.reshape(C2, 1)
    shift = shift_vec.reshape(C2, 1)

    out_bytes = jnp.dtype(out_dtype).itemsize
    cap = _vmem_cap_bytes()

    if k == 1:
        # ------------------------- pointwise GEMM path -----------------------
        x3 = x.reshape(B, C1, HW)
        x3 = jnp.pad(x3, ((0, 0), (0, 0), (0, HWp - HW)))      # lane-dense pad
        w2 = w.reshape(C2, C1).astype(jnp.bfloat16)             # tiny; cast once

        thw = _pick_pixel_tile(HWp, C1, C2, B, out_bytes, cap // 2)
        est = ((2 * C1 * 4 + C1 * 2 + 2 * C2 * out_bytes + C2 * 4) * thw
               + C2 * C1 * 2 + 2 * C2 * 4)

        out = pl.pallas_call(
            _pw_conv_kernel,
            out_shape=jax.ShapeDtypeStruct((B, C2, HWp), out_dtype),
            grid=(B, HWp // thw),
            in_specs=[
                pl.BlockSpec((None, C1, thw), lambda b, j: (b, 0, j)),  # X tile
                pl.BlockSpec((C2, C1), lambda b, j: (0, 0)),            # W resident
                pl.BlockSpec((C2, 1), lambda b, j: (0, 0)),             # BN scale
                pl.BlockSpec((C2, 1), lambda b, j: (0, 0)),             # BN shift
            ],
            out_specs=pl.BlockSpec((None, C2, thw), lambda b, j: (b, 0, j)),
            compiler_params=pltpu.CompilerParams(
                dimension_semantics=("parallel", "parallel"),
                vmem_limit_bytes=_vmem_limit(est, cap)),
        )(x3, w2, scale, shift)
    else:
        # ----------------- k x k conv: in-VMEM im2col GEMM path --------------
        # Pad ONCE along H, flatten the spatial axes, and add p elements of
        # zero-padding at each flattened end so every tap is a contiguous
        # static slice of this single copy (no k*k HBM tap slab).
        # TODO(synk): for very large spatial extents, additionally tile the
        # pixel axis (this path keeps one image per batch element in VMEM).
        Hp = H + 2 * pad
        L = HWp + 2 * pad * W + 2 * pad
        xq = jnp.pad(x, ((0, 0), (0, 0), (pad, pad), (0, 0)))
        xf = xq.reshape(B, C1, Hp * W)
        xf = jnp.pad(xf, ((0, 0), (0, 0), (pad, L - pad - Hp * W)))

        # Weights with contraction order (dy, dx, c1) to match the tap concat.
        wf = jnp.transpose(w, (0, 2, 3, 1)).reshape(C2, k * k * C1)
        wf = wf.astype(jnp.bfloat16)

        # Per-dx masks that zero the width wrap-around of the flattened slices.
        q = jnp.arange(HWp, dtype=jnp.int32) % W
        masks = jnp.stack(
            [((q + dx - pad >= 0) & (q + dx - pad < W)).astype(jnp.float32)
             for dx in range(k)], axis=0)                       # (k, HWp)

        kern = functools.partial(_im2col_conv_kernel,
                                 k=k, pad=pad, width=W, hwp=HWp)
        est = (2 * C1 * L * 4                       # x block, double-buffered
               + k * k * C1 * HWp * (2 + 4)         # im2col bf16 + f32 temps
               + 2 * C2 * HWp * out_bytes           # output, double-buffered
               + C2 * HWp * 4                       # f32 epilogue
               + C2 * C1 * k * k * 2 + k * HWp * 4)

        out = pl.pallas_call(
            kern,
            out_shape=jax.ShapeDtypeStruct((B, C2, HWp), out_dtype),
            grid=(B,),
            in_specs=[
                pl.BlockSpec((None, C1, L), lambda b: (b, 0, 0)),       # X (1 copy)
                pl.BlockSpec((C2, k * k * C1), lambda b: (0, 0)),       # W resident
                pl.BlockSpec((k, HWp), lambda b: (0, 0)),               # wrap masks
                pl.BlockSpec((C2, 1), lambda b: (0, 0)),                # BN scale
                pl.BlockSpec((C2, 1), lambda b: (0, 0)),                # BN shift
            ],
            out_specs=pl.BlockSpec((None, C2, HWp), lambda b: (b, 0, 0)),
            compiler_params=pltpu.CompilerParams(
                dimension_semantics=("parallel",),
                vmem_limit_bytes=_vmem_limit(est, cap)),
        )(xf, wf, masks, scale, shift)

    return out[:, :, :HW].reshape(B, C2, H, W)


# ----------------------------------------------------------------------------
# Pure-JAX reference for verification
# ----------------------------------------------------------------------------
def ref_forward(x, w, gamma, beta, mean, var, k=1, eps=1e-5):
    pad = k // 2
    y = jax.lax.conv_general_dilated(
        x, w, window_strides=(1, 1), padding=[(pad, pad), (pad, pad)],
        dimension_numbers=("NCHW", "OIHW", "NCHW"),
        precision=jax.lax.Precision.HIGHEST)
    scale = (gamma / jnp.sqrt(var + eps)).reshape(1, -1, 1, 1)
    shift = (beta - mean * gamma / jnp.sqrt(var + eps)).reshape(1, -1, 1, 1)
    y = y * scale + shift
    return y * jax.nn.sigmoid(y)


# ----------------------------------------------------------------------------
# Deterministic example run
# ----------------------------------------------------------------------------
if __name__ == "__main__":
    key = jax.random.PRNGKey(0)
    kx, kp = jax.random.split(key)

    # Conv(c1=32, c2=64): defaults k=1, s=1, p=autopad, g=1, d=1, act=SiLU.
    B, C1, C2, H, W = 2, 32, 64, 16, 16
    x = jax.random.normal(kx, (B, C1, H, W), jnp.float32)

    fwd = jax.jit(conv_bn_silu, static_argnames=("k", "eps", "out_dtype"))

    # k=1 is the module default; k=3 exercises the folded-tap im2col path.
    for k in (1, 3):
        kk = jax.random.fold_in(kp, k)
        kw_, kg, kb, km, kv = jax.random.split(kk, 5)
        w = (0.05 * jax.random.normal(kw_, (C2, C1, k, k))).astype(jnp.float32)
        gamma = (1.0 + 0.1 * jax.random.normal(kg, (C2,))).astype(jnp.float32)
        beta = (0.1 * jax.random.normal(kb, (C2,))).astype(jnp.float32)
        mean = (0.05 * jax.random.normal(km, (C2,))).astype(jnp.float32)
        var = (1.0 + 0.2 * jax.random.uniform(kv, (C2,))).astype(jnp.float32)

        out = jax.block_until_ready(fwd(x, w, gamma, beta, mean, var, k=k))
        ref = jax.block_until_ready(ref_forward(x, w, gamma, beta, mean, var, k=k))
        assert out.shape == (B, C2, H, W), out.shape
        max_err = float(jnp.max(jnp.abs(out.astype(jnp.float32) - ref)))
        assert max_err < 5e-2, f"k={k}: max abs err vs reference = {max_err}"

    print("KERNEL_OK")
</pallas_src>

<mosaic_0001>
module attributes {stable_mosaic.version = 11 : i64} {
  func.func @_pw_conv_kernel(%arg0: i32, %arg1: i32, %arg2: memref<1x32x256xf32, #tpu.memory_space<vmem>>, %arg3: memref<64x32xbf16, #tpu.memory_space<vmem>>, %arg4: memref<64x1xf32, #tpu.memory_space<vmem>>, %arg5: memref<64x1xf32, #tpu.memory_space<vmem>>, %arg6: memref<1x64x256xbf16, #tpu.memory_space<vmem>>) attributes {dimension_semantics = [#tpu.dimension_semantics<parallel>, #tpu.dimension_semantics<parallel>], iteration_bounds = array<i64: 2, 1>, scalar_prefetch = 0 : i64, scratch_operands = 0 : i64, tpu.core_type = #tpu.core_type<tc>, window_params = [{transform_indices = @transform_0, window_bounds = array<i64: 1, 32, 256>}, {pipeline_mode = #tpu.pipeline_mode<synchronous>, transform_indices = @transform_1, window_bounds = array<i64: 64, 32>}, {pipeline_mode = #tpu.pipeline_mode<synchronous>, transform_indices = @transform_2, window_bounds = array<i64: 64, 1>}, {pipeline_mode = #tpu.pipeline_mode<synchronous>, transform_indices = @transform_3, window_bounds = array<i64: 64, 1>}, {transform_indices = @transform_4, window_bounds = array<i64: 1, 64, 256>}]} {
    %c0 = arith.constant 0 : index
    %c0_0 = arith.constant 0 : index
    %0 = vector.load %arg3[%c0, %c0_0] : memref<64x32xbf16, #tpu.memory_space<vmem>>, vector<64x32xbf16>
    %c0_1 = arith.constant 0 : index
    %c0_2 = arith.constant 0 : index
    %c0_3 = arith.constant 0 : index
    %1 = vector.load %arg2[%c0_1, %c0_2, %c0_3] : memref<1x32x256xf32, #tpu.memory_space<vmem>>, vector<1x32x256xf32>
    %2 = vector.shape_cast %1 : vector<1x32x256xf32> to vector<32x256xf32>
    %3 = arith.truncf %2 : vector<32x256xf32> to vector<32x256xbf16>
    %cst = arith.constant dense<0.000000e+00> : vector<64x256xf32>
    %4 = tpu.matmul %0, %3, %cst {dimension_numbers = #tpu.dot_dimension_numbers<[1], [0], [0], [1], [0, 0, 1, 1], [], []>} : vector<64x32xbf16>, vector<32x256xbf16>, vector<64x256xf32> -> vector<64x256xf32>
    %c0_4 = arith.constant 0 : index
    %c0_5 = arith.constant 0 : index
    %5 = vector.load %arg4[%c0_4, %c0_5] : memref<64x1xf32, #tpu.memory_space<vmem>>, vector<64x1xf32>
    %6 = vector.broadcast %5 : vector<64x1xf32> to vector<64x256xf32>
    %7 = arith.mulf %4, %6 : vector<64x256xf32>
    %c0_6 = arith.constant 0 : index
    %c0_7 = arith.constant 0 : index
    %8 = vector.load %arg5[%c0_6, %c0_7] : memref<64x1xf32, #tpu.memory_space<vmem>>, vector<64x1xf32>
    %9 = vector.broadcast %8 : vector<64x1xf32> to vector<64x256xf32>
    %10 = arith.addf %7, %9 : vector<64x256xf32>
    %11 = arith.negf %10 : vector<64x256xf32>
    %12 = math.exp %11 : vector<64x256xf32>
    %cst_8 = arith.constant 1.000000e+00 : f32
    %13 = vector.broadcast %cst_8 : f32 to vector<64x256xf32>
    %14 = arith.addf %13, %12 : vector<64x256xf32>
    %15 = arith.divf %13, %14 : vector<64x256xf32>
    %16 = arith.mulf %10, %15 : vector<64x256xf32>
    %17 = arith.truncf %16 : vector<64x256xf32> to vector<64x256xbf16>
    %c0_9 = arith.constant 0 : index
    %c0_10 = arith.constant 0 : index
    %c0_11 = arith.constant 0 : index
    %18 = vector.load %arg6[%c0_9, %c0_10, %c0_11] : memref<1x64x256xbf16, #tpu.memory_space<vmem>>, vector<1x64x256xbf16>
    %19 = vector.shape_cast %18 : vector<1x64x256xbf16> to vector<64x256xbf16>
    %20 = vector.shape_cast %17 : vector<64x256xbf16> to vector<1x64x256xbf16>
    tpu.vector_store %arg6[%c0_9, %c0_10, %c0_11], %20 {strides = array<i32>} : memref<1x64x256xbf16, #tpu.memory_space<vmem>>, vector<1x64x256xbf16>,
    return
  }
  func.func @transform_0(%arg0: i32, %arg1: i32) -> (i32, i32, i32) {
    %c0_i32 = arith.constant 0 : i32
    %c0_i32_0 = arith.constant 0 : i32
    return %arg0, %c0_i32, %arg1 : i32, i32, i32
  }
  func.func @transform_1(%arg0: i32, %arg1: i32) -> (i32, i32) {
    %c0_i32 = arith.constant 0 : i32
    %c0_i32_0 = arith.constant 0 : i32
    %c0_i32_1 = arith.constant 0 : i32
    return %c0_i32, %c0_i32_0 : i32, i32
  }
  func.func @transform_2(%arg0: i32, %arg1: i32) -> (i32, i32) {
    %c0_i32 = arith.constant 0 : i32
    %c0_i32_0 = arith.constant 0 : i32
    %c0_i32_1 = arith.constant 0 : i32
    return %c0_i32, %c0_i32_0 : i32, i32
  }
  func.func @transform_3(%arg0: i32, %arg1: i32) -> (i32, i32) {
    %c0_i32 = arith.constant 0 : i32
    %c0_i32_0 = arith.constant 0 : i32
    %c0_i32_1 = arith.constant 0 : i32
    return %c0_i32, %c0_i32_0 : i32, i32
  }
  func.func @transform_4(%arg0: i32, %arg1: i32) -> (i32, i32, i32) {
    %c0_i32 = arith.constant 0 : i32
    %c0_i32_0 = arith.constant 0 : i32
    return %arg0, %c0_i32, %arg1 : i32, i32, i32
  }
}

</mosaic_0001>

<llo_original>
// kernel: conv_bn_silu.1
$region0: #{conv_bn_silu.1}
  #allocation0 [shape = 'u32[]', space=smem, size = 0x4, offset = 0x4, fixed_abs, tag = 'smem constant byte address 0x4 - core index']
  #allocation1 [shape = 'u32[144,128]{1,0:T(1,128)}', space=vmem, size = 0x12000, scoped, tag = 'internal scratch']
  %s0 = inlined_call_operand.vmem [shape: f32[2,32,256], index: 0, kind: input, shape index: {}]
  %s1 = inlined_call_operand.vmem [shape: bf16[64,32], index: 1, kind: input, shape index: {}]
  %s2 = inlined_call_operand.vmem [shape: f32[64,1], index: 2, kind: input, shape index: {}]
  %s3 = inlined_call_operand.vmem [shape: f32[64,1], index: 3, kind: input, shape index: {}]
  %s4 = inlined_call_operand.vmem [shape: bf16[2,64,256], index: 4, kind: output, shape index: {}]
  %s5 = sld [smem:[#allocation0]]
  $region49: #{conv_bn_silu.1} parent=0
    _
  %s7 = ssub.s32 1, %s5
  %s8 = scalar_select 0, %s7, %s5
  loop: start=0, step=1, limit=4
  $region2: #{conv_bn_silu.1} parent=0 // loop_pre_header
    _
  $region3: #{conv_bn_silu.1} parent=0 // loop_header
    %s10 = sphi 0, %s14
    %p11 = scmp.ge.s32.totalorder %s10, 4
    %s17 = sphi 0, %s29
    %s18 = sphi 0, %s25
    %s19 = sphi 0, %s17
    %s20 = sphi 0, %s18
    %s21 = sphi 0, %s19
    %s22 = sphi 0, %s20
    %s34 = sphi 0, %s36
    %s37 = sphi 0, %s34
    %s38 = sphi 0, %s37
    %s54 = sphi 0, %s38
    %s58 = sphi 0, %s58
    %s60 = sphi 0, %s58
    %s61 = sphi 0, %s60
    %s75 = sphi 0, %s61
    %s79 = sphi 0, %s79
    %s81 = sphi 0, %s79
    %s82 = sphi 0, %s81
    %s96 = sphi 0, %s82
    %s100 = sphi 0, %s100
    %s102 = sphi 0, %s100
    %s103 = sphi 0, %s102
    %s117 = sphi 0, %s103
    %s125 = sphi 0, %s127
    %s128 = sphi 0, %s125
    %s129 = sphi 0, %s128
    %s145 = sphi 0, %s129
  $region4: #{conv_bn_silu.1} parent=0 // loop_header_branch
    %13 = sbr.rel (%p11) target = $region8
  $region5: #{conv_bn_silu.1} parent=0 // loop_body
    %s15 = ssub.s32 %s10, 1
    %s16 = ssub.s32 %s10, 2
    %s23 = sadd.s32 1, %s18
    %p24 = scmp.ge.s32.totalorder %s23, 1
    %s25 = scalar_select %p24, 0, %s23
    %s26 = sadd.s32 1, %s17
    %s27 = scalar_select %p24, %s26, %s17
    %p28 = scmp.ge.s32.totalorder %s27, 2
    %s29 = scalar_select %p28, 0, %s27
    %s30 = ssub.s32 %s17, %s29
    %s31 = ssub.s32 %s18, %s25
    %s32 = sor.u32 %s30, %s31
    %p33 = scmp.eq.s32.totalorder %s32, 0
    %s35 = sadd.s32 %s34, 1
    %s36 = scalar_select %p33, %s34, %s35
    %p39 = pneg %p33
    %p40 = scmp.eq.s32.totalorder %s10, 1
    %p41 = por %p39, %p40
    %p42 = scmp.ne.s32.totalorder %s34, %s37
    %p43 = scmp.eq.s32.totalorder %s10, 0
    %p44 = por %p42, %p43
    %p45 = scmp.ne.s32.totalorder %s34, %s37
    %p46 = scmp.eq.s32.totalorder %s15, 1
    %p47 = por %p45, %p46
    %p48 = scmp.ne.s32.totalorder %s37, %s38
    %p49 = scmp.eq.s32.totalorder %s15, 0
    %p50 = por %p48, %p49
    %p51 = scmp.ne.s32.totalorder %s37, %s38
    %p52 = scmp.eq.s32.totalorder %s16, 1
    %p53 = por %p51, %p52
    %p55 = scmp.ne.s32.totalorder %s38, %s54
    %p56 = scmp.eq.s32.totalorder %s16, 0
    %p57 = por %p55, %p56
    %s59 = sadd.s32 %s58, 1
    %p62 = scmp.eq.s32.totalorder %s10, 1
    %p63 = scmp.ne.s32.totalorder %s58, %s60
    %p64 = scmp.eq.s32.totalorder %s10, 0
    %p65 = por %p63, %p64
    %p66 = scmp.ne.s32.totalorder %s58, %s60
    %p67 = scmp.eq.s32.totalorder %s15, 1
    %p68 = por %p66, %p67
    %p69 = scmp.ne.s32.totalorder %s60, %s61
    %p70 = scmp.eq.s32.totalorder %s15, 0
    %p71 = por %p69, %p70
    %p72 = scmp.ne.s32.totalorder %s60, %s61
    %p73 = scmp.eq.s32.totalorder %s16, 1
    %p74 = por %p72, %p73
    %p76 = scmp.ne.s32.totalorder %s61, %s75
    %p77 = scmp.eq.s32.totalorder %s16, 0
    %p78 = por %p76, %p77
    %s80 = sadd.s32 %s79, 1
    %p83 = scmp.eq.s32.totalorder %s10, 1
    %p84 = scmp.ne.s32.totalorder %s79, %s81
    %p85 = scmp.eq.s32.totalorder %s10, 0
    %p86 = por %p84, %p85
    %p87 = scmp.ne.s32.totalorder %s79, %s81
    %p88 = scmp.eq.s32.totalorder %s15, 1
    %p89 = por %p87, %p88
    %p90 = scmp.ne.s32.totalorder %s81, %s82
    %p91 = scmp.eq.s32.totalorder %s15, 0
    %p92 = por %p90, %p91
    %p93 = scmp.ne.s32.totalorder %s81, %s82
    %p94 = scmp.eq.s32.totalorder %s16, 1
    %p95 = por %p93, %p94
    %p97 = scmp.ne.s32.totalorder %s82, %s96
    %p98 = scmp.eq.s32.totalorder %s16, 0
    %p99 = por %p97, %p98
    %s101 = sadd.s32 %s100, 1
    %p104 = scmp.eq.s32.totalorder %s10, 1
    %p105 = scmp.ne.s32.totalorder %s100, %s102
    %p106 = scmp.eq.s32.totalorder %s10, 0
    %p107 = por %p105, %p106
    %p108 = scmp.ne.s32.totalorder %s100, %s102
    %p109 = scmp.eq.s32.totalorder %s15, 1
    %p110 = por %p108, %p109
    %p111 = scmp.ne.s32.totalorder %s102, %s103
    %p112 = scmp.eq.s32.totalorder %s15, 0
    %p113 = por %p111, %p112
    %p114 = scmp.ne.s32.totalorder %s102, %s103
    %p115 = scmp.eq.s32.totalorder %s16, 1
    %p116 = por %p114, %p115
    %p118 = scmp.ne.s32.totalorder %s103, %s117
    %p119 = scmp.eq.s32.totalorder %s16, 0
    %p120 = por %p118, %p119
    %s121 = ssub.s32 %s17, %s29
    %s122 = ssub.s32 %s18, %s25
    %s123 = sor.u32 %s121, %s122
    %p124 = scmp.eq.s32.totalorder %s123, 0
    %s126 = sadd.s32 %s125, 1
    %s127 = scalar_select %p124, %s125, %s126
    %p130 = pneg %p124
    %p131 = scmp.eq.s32.totalorder %s10, 1
    %p132 = por %p130, %p131
    %p133 = scmp.ne.s32.totalorder %s125, %s128
    %p134 = scmp.eq.s32.totalorder %s10, 0
    %p135 = por %p133, %p134
    %p136 = scmp.ne.s32.totalorder %s125, %s128
    %p137 = scmp.eq.s32.totalorder %s15, 1
    %p138 = por %p136, %p137
    %p139 = scmp.ne.s32.totalorder %s128, %s129
    %p140 = scmp.eq.s32.totalorder %s15, 0
    %p141 = por %p139, %p140
    %p142 = scmp.ne.s32.totalorder %s128, %s129
    %p143 = scmp.eq.s32.totalorder %s16, 1
    %p144 = por %p142, %p143
    %p146 = scmp.ne.s32.totalorder %s129, %s145
    %p147 = scmp.eq.s32.totalorder %s16, 0
    %p148 = por %p146, %p147
    %p149 = scmp.le.s32.totalorder 1, %s10
    %p150 = scmp.lt.s32.totalorder %s10, 3
    %p151 = pnand %p149, %p150
    %p152 = pneg %p151
    // Predicated region
    $region9: #{conv_bn_silu.1} parent=5 // pred_check
      _
    $region10: #{conv_bn_silu.1} parent=5 // pred_check_branch
      %154 = sbr.rel (%p151) target = $region12
    $region11: #{conv_bn_silu.1} parent=5 // pred_region
      %s155 = ssub.s32 %s10, 1
      // Predicated region
      $region13: #{conv_bn_silu.1} parent=11 // pred_check
        %p156 = pneg %p71
      $region14: #{conv_bn_silu.1} parent=11 // pred_check_branch
        %158 = sbr.rel (%p156) target = $region16
      $region15: #{conv_bn_silu.1} parent=11 // pred_region
        _
      $region16: #{conv_bn_silu.1} parent=11 // pred_fallthru
        _
      // Predicated region
      $region17: #{conv_bn_silu.1} parent=11 // pred_check
        %p159 = pneg %p92
      $region18: #{conv_bn_silu.1} parent=11 // pred_check_branch
        %161 = sbr.rel (%p159) target = $region20
      $region19: #{conv_bn_silu.1} parent=11 // pred_region
        _
      $region20: #{conv_bn_silu.1} parent=11 // pred_fallthru
        _
      // Predicated region
      $region21: #{conv_bn_silu.1} parent=11 // pred_check
        %p162 = pneg %p113
      $region22: #{conv_bn_silu.1} parent=11 // pred_check_branch
        %164 = sbr.rel (%p162) target = $region24
      $region23: #{conv_bn_silu.1} parent=11 // pred_region
        _
      $region24: #{conv_bn_silu.1} parent=11 // pred_fallthru
        _
    $region12: #{conv_bn_silu.1} parent=5 // pred_fallthru
      _
    %p165 = scmp.lt.s32.totalorder %s10, 2
    // Predicated region
    $region25: #{conv_bn_silu.1} parent=5 // pred_check
      %p166 = pneg %p165
    $region26: #{conv_bn_silu.1} parent=5 // pred_check_branch
      %168 = sbr.rel (%p166) target = $region28
    $region27: #{conv_bn_silu.1} parent=5 // pred_region
      // Predicated region
      $region29: #{conv_bn_silu.1} parent=27 // pred_check
        %p169 = pneg %p44
      $region30: #{conv_bn_silu.1} parent=27 // pred_check_branch
        %171 = sbr.rel (%p169) target = $region32
      $region31: #{conv_bn_silu.1} parent=27 // pred_region
        %s172 = smul.u32 2, %s18
        %p173 = scmp.lt.s32.totalorder %s17, 1
        %s174 = scalar_select %p173, %s17, 1
        %p175 = scmp.lt.s32.totalorder %s172, 1
        %s176 = scalar_select %p175, %s172, 1
        %s177 = smul.addr %s174, 8
        %s178 = sadd.s32 %s176, %s177
        %s179 = smul.addr %s178, 8
        %s180 = scalar_lea.vmem %s0, %s179
        %s181 = smul.u32 2, %s18
      $region32: #{conv_bn_silu.1} parent=27 // pred_fallthru
        _
    $region28: #{conv_bn_silu.1} parent=5 // pred_fallthru
      _
    %p182 = scmp.le.s32.totalorder 1, %s10
    %p183 = scmp.lt.s32.totalorder %s10, 3
    %p184 = pnand %p182, %p183
    %p185 = pneg %p184
    // Predicated region
    $region33: #{conv_bn_silu.1} parent=5 // pred_check
      _
    $region34: #{conv_bn_silu.1} parent=5 // pred_check_branch
      %187 = sbr.rel (%p184) target = $region36
    $region35: #{conv_bn_silu.1} parent=5 // pred_region
      %s188 = ssub.s32 %s10, 1
      %s189 = smul.u32 2, %s20
      %p190 = scmp.lt.s32.totalorder %s19, 1
      %s191 = scalar_select %p190, %s19, 1
      %p192 = scmp.lt.s32.totalorder %s189, 1
      %s193 = scalar_select %p192, %s189, 1
      %s194 = smul.addr %s191, 8
      %s195 = sadd.s32 %s193, %s194
      %s196 = smul.addr %s195, 8
      %s197 = scalar_lea.vmem %s0, %s196
      %p198 = pneg %p50
      %p199 = pneg %p47
      %p200 = pneg %p71
      %p201 = pneg %p68
      %p202 = pneg %p92
      %p203 = pneg %p89
      %p204 = pneg %p113
      %p205 = pneg %p110
      %p206 = pneg %p141
      %p207 = pneg %p138
      %s208 = smul.u32 2, %s20
      %p209 = scmp.lt.s32.totalorder %s19, 1
      %s210 = scalar_select %p209, %s19, 1
      %p211 = scmp.lt.s32.totalorder %s208, 1
      %s212 = scalar_select %p211, %s208, 1
      %s213 = smul.addr %s210, 16
      %s214 = sadd.s32 %s212, %s213
      %s215 = smul.addr %s214, 4
      %s216 = scalar_lea.vmem %s4, %s215
      %s217 = smul.u32 2, %s20
      %p218 = scmp.lt.s32.totalorder %s19, 1
      %s219 = scalar_select %p218, %s19, 1
      %p220 = scmp.lt.s32.totalorder %s217, 1
      %s221 = scalar_select %p220, %s217, 1
      %s222 = smul.addr %s219, 8
      %s223 = sadd.s32 %s221, %s222
      %s224 = smul.addr %s223, 8
      %s225 = scalar_lea.vmem %s0, %s224
      %s226 = smul.u32 2, %s20
      %s227 = smul.u32 2, %s20
      %p228 = scmp.lt.s32.totalorder %s19, 1
      %s229 = scalar_select %p228, %s19, 1
      %p230 = scmp.lt.s32.totalorder %s227, 1
      %s231 = scalar_select %p230, %s227, 1
      %s232 = smul.addr %s229, 16
      %s233 = sadd.s32 %s231, %s232
      %s234 = smul.addr %s233, 4
      %s235 = scalar_lea.vmem %s4, %s234
      %s236 = smul.u32 2, %s20
      %v238 = vld [vmem:[%s1] sm:$0xf]
      %v239 = vld [vmem:[%s1 + $0x4] sm:$0xf]
      %v240 = vld [vmem:[%s1 + $0x8] sm:$0xf]
      %v241 = vld [vmem:[%s1 + $0xc] sm:$0xf]
      %v242 = vld [vmem:[%s1 + $0x10] sm:$0xf]
      %v243 = vld [vmem:[%s1 + $0x14] sm:$0xf]
      %v244 = vld [vmem:[%s1 + $0x18] sm:$0xf]
      %v245 = vld [vmem:[%s1 + $0x1c] sm:$0xf]
      %v246 = vld [vmem:[%s225] sm:$0xff]
      %v247 = vld [vmem:[%s225 + $0x8] sm:$0xff]
      %v248 = vld [vmem:[%s225 + $0x10] sm:$0xff]
      %v249 = vld [vmem:[%s225 + $0x18] sm:$0xff]
      %v250 = vld [vmem:[%s225 + $0x20] sm:$0xff]
      %v251 = vld [vmem:[%s225 + $0x28] sm:$0xff]
      %v252 = vld [vmem:[%s225 + $0x30] sm:$0xff]
      %v253 = vld [vmem:[%s225 + $0x38] sm:$0xff]
      %v254 = vpack.c.bf16 %v248, %v246
      %v255 = vpack.c.bf16 %v249, %v247
      %v256 = vpack.c.bf16 %v252, %v250
      %v257 = vpack.c.bf16 %v253, %v251
      %v266 = vunpack.c.l.b16 %v238
      %v267 = vunpack.c.l.b16 %v239
      %v268 = vunpack.c.l.b16 %v240
      %v269 = vunpack.c.l.b16 %v241
      %v270 = vunpack.c.l.b16 %v242
      %v271 = vunpack.c.l.b16 %v243
      %v272 = vunpack.c.l.b16 %v244
      %v273 = vunpack.c.l.b16 %v245
      %v274 = vpack.c.b16 %v267, %v266
      %v275 = vpack.c.b16 %v269, %v268
      %v276 = vpack.c.b16 %v271, %v270
      %v277 = vpack.c.b16 %v273, %v272
      %vm278 = vcmask 261120
      %v280 = vsel %vm278, %v274, 0
      %v283 = vsel %vm278, %v275, 0
      %v286 = vsel %vm278, %v276, 0
      %v289 = vsel %vm278, %v277, 0
      %291 = vmatprep.subr.bf16.mxu0 %v255
      %292 = vmatpush1.bf16.msra.mxu0 %v254
      %293 = vmatprep.subr.bf16.mxu0 %v257
      %294 = vmatpush1.bf16.msra.mxu0 %v256
      %295 = vmatprep.subr.bf16.mxu0 0
      %296 = vmatpush1.bf16.msra.mxu0 0
      %297 = vmatprep.subr.bf16.mxu0 0
      %298 = vmatpush1.bf16.msra.mxu0 0
      %299 = vmatprep.subr.bf16.mxu0 0
      %300 = vmatpush1.bf16.msra.mxu0 0
      %301 = vmatprep.subr.bf16.mxu0 0
      %302 = vmatpush1.bf16.msra.mxu0 0
      %303 = vmatprep.subr.bf16.mxu0 0
      %304 = vmatpush1.bf16.msra.mxu0 0
      %305 = vmatprep.subr.bf16.mxu0 0
      %306 = vmatpush1.bf16.msra.mxu0 0
      %307 = vmatprep.subr.bf16.mxu0 0
      %308 = vmatpush1.bf16.msra.mxu0 0
      %309 = vmatprep.subr.bf16.mxu0 0
      %310 = vmatpush1.bf16.msra.mxu0 0
      %311 = vmatprep.subr.bf16.mxu0 0
      %312 = vmatpush1.bf16.msra.mxu0 0
      %313 = vmatprep.subr.bf16.mxu0 0
      %314 = vmatpush1.bf16.msra.mxu0 0
      %315 = vmatprep.subr.bf16.mxu0 0
      %316 = vmatpush1.bf16.msra.mxu0 0
      %317 = vmatprep.subr.bf16.mxu0 0
      %318 = vmatpush1.bf16.msra.mxu0 0
      %319 = vmatprep.subr.bf16.mxu0 0
      %320 = vmatpush1.bf16.msra.mxu0 0
      %321 = vmatprep.subr.bf16.mxu0 0
      %322 = vmatpush1.bf16.msra.mxu0 0
      %323 = vmatprep.mubr.bf16.mxu0 0
      %324 = vmatmul.mubr.bf16.gmra.mrb[0].mxu0 %v280
      %v325 = vpop.f32.mrb[0].mxu0
      %v326 = vadd.f32 0.0, %v325
      %v327 = vpop.f32.mrb[0].mxu0
      %v328 = vadd.f32 0.0, %v327
      %v329 = vpop.f32.mrb[0].mxu0
      %v330 = vadd.f32 0.0, %v329
      %v331 = vpop.f32.mrb[0].mxu0
      %v332 = vadd.f32 0.0, %v331
      %333 = vmatprep.mubr.bf16.mxu0 0
      %334 = vmatmul.mubr.bf16.gmra.mrb[0].mxu0 %v283
      %v335 = vpop.f32.mrb[0].mxu0
      %v336 = vadd.f32 0.0, %v335
      %v337 = vpop.f32.mrb[0].mxu0
      %v338 = vadd.f32 0.0, %v337
      %v339 = vpop.f32.mrb[0].mxu0
      %v340 = vadd.f32 0.0, %v339
      %v341 = vpop.f32.mrb[0].mxu0
      %v342 = vadd.f32 0.0, %v341
      %343 = vmatprep.mubr.bf16.mxu0 0
      %344 = vmatmul.mubr.bf16.gmra.mrb[0].mxu0 %v286
      %v345 = vpop.f32.mrb[0].mxu0
      %v346 = vadd.f32 0.0, %v345
      %v347 = vpop.f32.mrb[0].mxu0
      %v348 = vadd.f32 0.0, %v347
      %v349 = vpop.f32.mrb[0].mxu0
      %v350 = vadd.f32 0.0, %v349
      %v351 = vpop.f32.mrb[0].mxu0
      %v352 = vadd.f32 0.0, %v351
      %353 = vmatprep.mubr.bf16.mxu0 0
      %354 = vmatmul.mubr.bf16.gmra.mrb[0].mxu0 %v289
      %v355 = vpop.f32.mrb[0].mxu0
      %v356 = vadd.f32 0.0, %v355
      %v357 = vpop.f32.mrb[0].mxu0
      %v358 = vadd.f32 0.0, %v357
      %v359 = vpop.f32.mrb[0].mxu0
      %v360 = vadd.f32 0.0, %v359
      %v361 = vpop.f32.mrb[0].mxu0
      %v362 = vadd.f32 0.0, %v361
      %363 = vdwg.mxu0
      %v364 = vld [vmem:[%s2] sm:$0xff]
      %v365 = vld [vmem:[%s2 + $0x8] sm:$0xff]
      %v366 = vld [vmem:[%s2 + $0x10] sm:$0xff]
      %v367 = vld [vmem:[%s2 + $0x18] sm:$0xff]
      %v368 = vld [vmem:[%s2 + $0x20] sm:$0xff]
      %v369 = vld [vmem:[%s2 + $0x28] sm:$0xff]
      %v370 = vld [vmem:[%s2 + $0x30] sm:$0xff]
      %v371 = vld [vmem:[%s2 + $0x38] sm:$0xff]
      %373 = vset.pattern.permute.xlu0 0
      %374 = vperm.xlu0 %373, %v364
      %v375 = vpop.permute.xlu0 %374
      %378 = vset.pattern.permute.xlu0 0
      %379 = vperm.xlu0 %378, %v365
      %v380 = vpop.permute.xlu0 %379
      %383 = vset.pattern.permute.xlu0 0
      %384 = vperm.xlu0 %383, %v366
      %v385 = vpop.permute.xlu0 %384
      %388 = vset.pattern.permute.xlu0 0
      %389 = vperm.xlu0 %388, %v367
      %v390 = vpop.permute.xlu0 %389
      %393 = vset.pattern.permute.xlu0 0
      %394 = vperm.xlu0 %393, %v368
      %v395 = vpop.permute.xlu0 %394
      %398 = vset.pattern.permute.xlu0 0
      %399 = vperm.xlu0 %398, %v369
      %v400 = vpop.permute.xlu0 %399
      %403 = vset.pattern.permute.xlu0 0
      %404 = vperm.xlu0 %403, %v370
      %v405 = vpop.permute.xlu0 %404
      %408 = vset.pattern.permute.xlu0 0
      %409 = vperm.xlu0 %408, %v371
      %v410 = vpop.permute.xlu0 %409
      %v412 = vmul.f32 %v326, %v375
      %v413 = vmul.f32 %v328, %v375
      %v414 = vmul.f32 %v330, %v380
      %v415 = vmul.f32 %v332, %v380
      %v416 = vmul.f32 %v336, %v385
      %v417 = vmul.f32 %v338, %v385
      %v418 = vmul.f32 %v340, %v390
      %v419 = vmul.f32 %v342, %v390
      %v420 = vmul.f32 %v346, %v395
      %v421 = vmul.f32 %v348, %v395
      %v422 = vmul.f32 %v350, %v400
      %v423 = vmul.f32 %v352, %v400
      %v424 = vmul.f32 %v356, %v405
      %v425 = vmul.f32 %v358, %v405
      %v426 = vmul.f32 %v360, %v410
      %v427 = vmul.f32 %v362, %v410
      %v428 = vld [vmem:[%s3] sm:$0xff]
      %v429 = vld [vmem:[%s3 + $0x8] sm:$0xff]
      %v430 = vld [vmem:[%s3 + $0x10] sm:$0xff]
      %v431 = vld [vmem:[%s3 + $0x18] sm:$0xff]
      %v432 = vld [vmem:[%s3 + $0x20] sm:$0xff]
      %v433 = vld [vmem:[%s3 + $0x28] sm:$0xff]
      %v434 = vld [vmem:[%s3 + $0x30] sm:$0xff]
      %v435 = vld [vmem:[%s3 + $0x38] sm:$0xff]
      %437 = vset.pattern.permute.xlu0 0
      %438 = vperm.xlu0 %437, %v428
      %v439 = vpop.permute.xlu0 %438
      %442 = vset.pattern.permute.xlu0 0
      %443 = vperm.xlu0 %442, %v429
      %v444 = vpop.permute.xlu0 %443
      %447 = vset.pattern.permute.xlu0 0
      %448 = vperm.xlu0 %447, %v430
      %v449 = vpop.permute.xlu0 %448
      %452 = vset.pattern.permute.xlu0 0
      %453 = vperm.xlu0 %452, %v431
      %v454 = vpop.permute.xlu0 %453
      %457 = vset.pattern.permute.xlu0 0
      %458 = vperm.xlu0 %457, %v432
      %v459 = vpop.permute.xlu0 %458
      %462 = vset.pattern.permute.xlu0 0
      %463 = vperm.xlu0 %462, %v433
      %v464 = vpop.permute.xlu0 %463
      %467 = vset.pattern.permute.xlu0 0
      %468 = vperm.xlu0 %467, %v434
      %v469 = vpop.permute.xlu0 %468
      %472 = vset.pattern.permute.xlu0 0
      %473 = vperm.xlu0 %472, %v435
      %v474 = vpop.permute.xlu0 %473
      %v476 = vadd.f32 %v412, %v439
      %v477 = vadd.f32 %v413, %v439
      %v478 = vadd.f32 %v414, %v444
      %v479 = vadd.f32 %v415, %v444
      %v480 = vadd.f32 %v416, %v449
      %v481 = vadd.f32 %v417, %v449
      %v482 = vadd.f32 %v418, %v454
      %v483 = vadd.f32 %v419, %v454
      %v484 = vadd.f32 %v420, %v459
      %v485 = vadd.f32 %v421, %v459
      %v486 = vadd.f32 %v422, %v464
      %v487 = vadd.f32 %v423, %v464
      %v488 = vadd.f32 %v424, %v469
      %v489 = vadd.f32 %v425, %v469
      %v490 = vadd.f32 %v426, %v474
      %v491 = vadd.f32 %v427, %v474
      %v492 = vxor.u32 %v476, 2147483648
      %v493 = vxor.u32 %v477, 2147483648
      %v494 = vxor.u32 %v478, 2147483648
      %v495 = vxor.u32 %v479, 2147483648
      %v496 = vxor.u32 %v480, 2147483648
      %v497 = vxor.u32 %v481, 2147483648
      %v498 = vxor.u32 %v482, 2147483648
      %v499 = vxor.u32 %v483, 2147483648
      %v500 = vxor.u32 %v484, 2147483648
      %v501 = vxor.u32 %v485, 2147483648
      %v502 = vxor.u32 %v486, 2147483648
      %v503 = vxor.u32 %v487, 2147483648
      %v504 = vxor.u32 %v488, 2147483648
      %v505 = vxor.u32 %v489, 2147483648
      %v506 = vxor.u32 %v490, 2147483648
      %v507 = vxor.u32 %v491, 2147483648
      %v508 = vmul.f32 %v492, 1.442695
      %v509 = vpow.pop %v508
      %v510 = vmul.f32 %v493, 1.442695
      %v511 = vpow.pop %v510
      %v512 = vmul.f32 %v494, 1.442695
      %v513 = vpow.pop %v512
      %v514 = vmul.f32 %v495, 1.442695
      %v515 = vpow.pop %v514
      %v516 = vmul.f32 %v496, 1.442695
      %v517 = vpow.pop %v516
      %v518 = vmul.f32 %v497, 1.442695
      %v519 = vpow.pop %v518
      %v520 = vmul.f32 %v498, 1.442695
      %v521 = vpow.pop %v520
      %v522 = vmul.f32 %v499, 1.442695
      %v523 = vpow.pop %v522
      %v524 = vmul.f32 %v500, 1.442695
      %v525 = vpow.pop %v524
      %v526 = vmul.f32 %v501, 1.442695
      %v527 = vpow.pop %v526
      %v528 = vmul.f32 %v502, 1.442695
      %v529 = vpow.pop %v528
      %v530 = vmul.f32 %v503, 1.442695
      %v531 = vpow.pop %v530
      %v532 = vmul.f32 %v504, 1.442695
      %v533 = vpow.pop %v532
      %v534 = vmul.f32 %v505, 1.442695
      %v535 = vpow.pop %v534
      %v536 = vmul.f32 %v506, 1.442695
      %v537 = vpow.pop %v536
      %v538 = vmul.f32 %v507, 1.442695
      %v539 = vpow.pop %v538
      %v540 = vadd.f32 %v509, 1.0
      %v541 = vadd.f32 %v511, 1.0
      %v542 = vadd.f32 %v513, 1.0
      %v543 = vadd.f32 %v515, 1.0
      %v544 = vadd.f32 %v517, 1.0
      %v545 = vadd.f32 %v519, 1.0
      %v546 = vadd.f32 %v521, 1.0
      %v547 = vadd.f32 %v523, 1.0
      %v548 = vadd.f32 %v525, 1.0
      %v549 = vadd.f32 %v527, 1.0
      %v550 = vadd.f32 %v529, 1.0
      %v551 = vadd.f32 %v531, 1.0
      %v552 = vadd.f32 %v533, 1.0
      %v553 = vadd.f32 %v535, 1.0
      %v554 = vadd.f32 %v537, 1.0
      %v555 = vadd.f32 %v539, 1.0
      %v556 = vrcp.pop %v540
      %v557 = vmul.f32 1.0, %v556
      %v558 = vrcp.pop %v541
      %v559 = vmul.f32 1.0, %v558
      %v560 = vrcp.pop %v542
      %v561 = vmul.f32 1.0, %v560
      %v562 = vrcp.pop %v543
      %v563 = vmul.f32 1.0, %v562
      %v564 = vrcp.pop %v544
      %v565 = vmul.f32 1.0, %v564
      %v566 = vrcp.pop %v545
      %v567 = vmul.f32 1.0, %v566
      %v568 = vrcp.pop %v546
      %v569 = vmul.f32 1.0, %v568
      %v570 = vrcp.pop %v547
      %v571 = vmul.f32 1.0, %v570
      %v572 = vrcp.pop %v548
      %v573 = vmul.f32 1.0, %v572
      %v574 = vrcp.pop %v549
      %v575 = vmul.f32 1.0, %v574
      %v576 = vrcp.pop %v550
      %v577 = vmul.f32 1.0, %v576
      %v578 = vrcp.pop %v551
      %v579 = vmul.f32 1.0, %v578
      %v580 = vrcp.pop %v552
      %v581 = vmul.f32 1.0, %v580
      %v582 = vrcp.pop %v553
      %v583 = vmul.f32 1.0, %v582
      %v584 = vrcp.pop %v554
      %v585 = vmul.f32 1.0, %v584
      %v586 = vrcp.pop %v555
      %v587 = vmul.f32 1.0, %v586
      %v588 = vmul.f32 %v476, %v557
      %v589 = vmul.f32 %v477, %v559
      %v590 = vmul.f32 %v478, %v561
      %v591 = vmul.f32 %v479, %v563
      %v592 = vmul.f32 %v480, %v565
      %v593 = vmul.f32 %v481, %v567
      %v594 = vmul.f32 %v482, %v569
      %v595 = vmul.f32 %v483, %v571
      %v596 = vmul.f32 %v484, %v573
      %v597 = vmul.f32 %v485, %v575
      %v598 = vmul.f32 %v486, %v577
      %v599 = vmul.f32 %v487, %v579
      %v600 = vmul.f32 %v488, %v581
      %v601 = vmul.f32 %v489, %v583
      %v602 = vmul.f32 %v490, %v585
      %v603 = vmul.f32 %v491, %v587
      %v604 = vpack.c.bf16 %v590, %v588
      %v605 = vpack.c.bf16 %v591, %v589
      %v606 = vpack.c.bf16 %v594, %v592
      %v607 = vpack.c.bf16 %v595, %v593
      %v608 = vpack.c.bf16 %v598, %v596
      %v609 = vpack.c.bf16 %v599, %v597
      %v610 = vpack.c.bf16 %v602, %v600
      %v611 = vpack.c.bf16 %v603, %v601
      %v620 = vunpack.c.l.b16 %v604
      %v621 = vunpack.c.l.b16 %v605
      %v622 = vunpack.c.h.b16 %v604
      %v623 = vunpack.c.h.b16 %v605
      %v624 = vunpack.c.l.b16 %v606
      %v625 = vunpack.c.l.b16 %v607
      %v626 = vunpack.c.h.b16 %v606
      %v627 = vunpack.c.h.b16 %v607
      %v628 = vunpack.c.l.b16 %v608
      %v629 = vunpack.c.l.b16 %v609
      %v630 = vunpack.c.h.b16 %v608
      %v631 = vunpack.c.h.b16 %v609
      %v632 = vunpack.c.l.b16 %v610
      %v633 = vunpack.c.l.b16 %v611
      %v634 = vunpack.c.h.b16 %v610
      %v635 = vunpack.c.h.b16 %v611
      %v636 = vpack.c.b16 %v621, %v620
      %v637 = vpack.c.b16 %v623, %v622
      %v638 = vpack.c.b16 %v625, %v624
      %v639 = vpack.c.b16 %v627, %v626
      %v640 = vpack.c.b16 %v629, %v628
      %v641 = vpack.c.b16 %v631, %v630
      %v642 = vpack.c.b16 %v633, %v632
      %v643 = vpack.c.b16 %v635, %v634
      %652 = vst [vmem:[%s235] sm:$0xff] %v636
      %653 = vst [vmem:[%s235 + $0x8] sm:$0xff] %v637
      %654 = vst [vmem:[%s235 + $0x10] sm:$0xff] %v638
      %655 = vst [vmem:[%s235 + $0x18] sm:$0xff] %v639
      %656 = vst [vmem:[%s235 + $0x20] sm:$0xff] %v640
      %657 = vst [vmem:[%s235 + $0x28] sm:$0xff] %v641
      %658 = vst [vmem:[%s235 + $0x30] sm:$0xff] %v642
      %659 = vst [vmem:[%s235 + $0x38] sm:$0xff] %v643
      %s660 = smul.u32 2, %s20
      %p661 = scmp.lt.s32.totalorder %s19, 1
      %s662 = scalar_select %p661, %s19, 1
      %p663 = scmp.lt.s32.totalorder %s660, 1
      %s664 = scalar_select %p663, %s660, 1
      %s665 = smul.addr %s662, 16
      %s666 = sadd.s32 %s664, %s665
      %s667 = smul.addr %s666, 4
      %s668 = scalar_lea.vmem %s4, %s667
      // Predicated region
      $region37: #{conv_bn_silu.1} parent=35 // pred_check
        %p669 = pneg %p138
      $region38: #{conv_bn_silu.1} parent=35 // pred_check_branch
        %671 = sbr.rel (%p669) target = $region40
      $region39: #{conv_bn_silu.1} parent=35 // pred_region
        %s672 = smul.u32 2, %s20
      $region40: #{conv_bn_silu.1} parent=35 // pred_fallthru
        _
    $region36: #{conv_bn_silu.1} parent=5 // pred_fallthru
      _
    %p673 = scmp.le.s32.totalorder 2, %s10
    // Predicated region
    $region41: #{conv_bn_silu.1} parent=5 // pred_check
      %p674 = pneg %p673
    $region42: #{conv_bn_silu.1} parent=5 // pred_check_branch
      %676 = sbr.rel (%p674) target = $region44
    $region43: #{conv_bn_silu.1} parent=5 // pred_region
      %s677 = ssub.s32 %s10, 2
      // Predicated region
      $region45: #{conv_bn_silu.1} parent=43 // pred_check
        %p678 = pneg %p144
      $region46: #{conv_bn_silu.1} parent=43 // pred_check_branch
        %680 = sbr.rel (%p678) target = $region48
      $region47: #{conv_bn_silu.1} parent=43 // pred_region
        %s681 = smul.u32 2, %s22
        %p682 = scmp.lt.s32.totalorder %s21, 1
        %s683 = scalar_select %p682, %s21, 1
        %p684 = scmp.lt.s32.totalorder %s681, 1
        %s685 = scalar_select %p684, %s681, 1
        %s686 = smul.addr %s683, 16
        %s687 = sadd.s32 %s685, %s686
        %s688 = smul.addr %s687, 4
        %s689 = scalar_lea.vmem %s4, %s688
      $region48: #{conv_bn_silu.1} parent=43 // pred_fallthru
        _
    $region44: #{conv_bn_silu.1} parent=5 // pred_fallthru
      _
  $region6: #{conv_bn_silu.1} parent=0 // loop_footer
    %s14 = sadd.s32 1, %s10
  $region7: #{conv_bn_silu.1} parent=0 // loop_footer_branch
    %9 = sbr.rel target = $region3
  $region8: #{conv_bn_silu.1} parent=0 // loop_exit
    _

</llo_original>
